<compile_context>
chip_gen: v5e
topology: v5e:2x2
jax: 0.10.0
libtpu: 0.0.40
codegen_flags: <defaults>
</compile_context>

<pallas_src>
import functools

import jax
import jax.numpy as jnp
from jax.experimental import pallas as pl
from jax.experimental.pallas import tpu as pltpu


_PAD_A1 = 1.0e6   # padding coordinate for the first point of a correspondence
_PAD_A2 = 0.0     # padding coordinate for the second point


def _round_up(x, m):
    return (x + m - 1) // m * m


def _embed_rows_cols(pts):
    """pts (B, N, 3) -> rows (B, N, 8), colsT (B, 8, N) such that
    rows[b, n] @ colsT[b, :, m] == |pts[b, n] - pts[b, m]|^2."""
    B, N, _ = pts.shape
    sq = jnp.sum(pts * pts, axis=-1, keepdims=True)                  # (B, N, 1)
    one = jnp.ones_like(sq)
    zero3 = jnp.zeros((B, N, 3), pts.dtype)
    rows = jnp.concatenate([pts, sq, one, zero3], axis=-1)           # (B, N, 8)
    cols = jnp.concatenate([-2.0 * pts, one, sq, zero3], axis=-1)    # (B, N, 8)
    return rows, jnp.transpose(cols, (0, 2, 1))                      # (B, 8, N)


def _score_kernel(a1_ref, a2_ref, b1_ref, b2_ref, mask_ref, delta_ref, *,
                  use_predator, inv_denom, cut_thresh):
    # a?_ref : (1, T, 8) embedded rows for output-row block i
    # b?_ref : (1, 8, T) embedded cols for output-col block j
    # mask_ref / delta_ref : (1, T, T) bf16 outputs (split score representation)
    d1 = jnp.maximum(jnp.dot(a1_ref[0], b1_ref[0],
                             preferred_element_type=jnp.float32), 0.0)
    d2 = jnp.maximum(jnp.dot(a2_ref[0], b2_ref[0],
                             preferred_element_type=jnp.float32), 0.0)
    # |sqrt(d1) - sqrt(d2)|^2 with a single EUP sqrt per element.
    dmat_sq = jnp.maximum(d1 + d2 - 2.0 * jnp.sqrt(d1 * d2), 0.0)
    if use_predator:
        s = 1.0 - dmat_sq * inv_denom
    else:
        s = jnp.exp(-dmat_sq * inv_denom)
    keep = s >= cut_thresh
    mask_ref[0] = keep.astype(jnp.bfloat16)                       # exact {0,1}
    delta_ref[0] = jnp.where(keep, s - 1.0, 0.0).astype(jnp.bfloat16)


def _contract_kernel(m_ik_ref, d_ik_ref, m_kj_ref, d_kj_ref,
                     m_ij_ref, d_ij_ref, out_ref, *, precision):
    # m/d_ik : (1, T, T) streaming row blocks (b, i, k)
    # m/d_kj : (1, T, T) streaming col blocks (b, k, j)
    # m/d_ij : (1, T, T) resident (b, i, j) tile for the final elementwise mul
    # out_ref: (1, T, T) f32, resident across k -> doubles as the accumulator
    k = pl.program_id(3)

    @pl.when(k == 0)
    def _():
        out_ref[...] = jnp.zeros_like(out_ref)

    if precision == "split":
        # s = mask + delta; (m+d)@(m+d) expanded into 4 bf16 MXU matmuls with
        # f32 accumulation: exact for mask@mask, full bf16 relative precision
        # for the small delta terms.
        m_ik, d_ik = m_ik_ref[0], d_ik_ref[0]
        m_kj, d_kj = m_kj_ref[0], d_kj_ref[0]
        acc = jnp.dot(m_ik, m_kj, preferred_element_type=jnp.float32)
        acc = acc + jnp.dot(m_ik, d_kj, preferred_element_type=jnp.float32)
        acc = acc + jnp.dot(d_ik, m_kj, preferred_element_type=jnp.float32)
        acc = acc + jnp.dot(d_ik, d_kj, preferred_element_type=jnp.float32)
    elif precision == "bf16":
        # Throughput path: single bf16 matmul (lossy for scores near 1.0).
        s_ik = (m_ik_ref[0].astype(jnp.float32)
                + d_ik_ref[0].astype(jnp.float32)).astype(jnp.bfloat16)
        s_kj = (m_kj_ref[0].astype(jnp.float32)
                + d_kj_ref[0].astype(jnp.float32)).astype(jnp.bfloat16)
        acc = jnp.dot(s_ik, s_kj, preferred_element_type=jnp.float32)
    else:  # "f32"
        s_ik = m_ik_ref[0].astype(jnp.float32) + d_ik_ref[0].astype(jnp.float32)
        s_kj = m_kj_ref[0].astype(jnp.float32) + d_kj_ref[0].astype(jnp.float32)
        acc = jnp.dot(s_ik, s_kj, preferred_element_type=jnp.float32)

    out_ref[0] = out_ref[0] + acc

    @pl.when(k == pl.num_programs(3) - 1)
    def _():
        s_ij = m_ij_ref[0].astype(jnp.float32) + d_ij_ref[0].astype(jnp.float32)
        out_ref[0] = s_ij * out_ref[0]


def graph_constructor_3dmatch(correspondence, resolution, name, descriptor,
                              inlier_thresh, *, precision="split", tile=None):
    """Pallas TPU implementation of GraphConstructorFor3DMatch.forward.

    correspondence : (B, N, 6) float32 (two stacked xyz points per row)
    resolution, inlier_thresh : python floats (static)
    name, descriptor : python strings (static branch selection)
    precision : "split" (default, bf16 MXU + f32 accuracy), "f32", "bf16"
    returns : (B, N, N) float32
    """
    correspondence = correspondence.astype(jnp.float32)
    B, N, C = correspondence.shape
    assert C == 6, "correspondence last dim must be 6 (two xyz points)"

    # Static branch resolution (mirrors the torch module).
    use_predator = (descriptor == 'predator')
    if use_predator:
        inv_denom = 1.0 / (float(inlier_thresh) ** 2)
        cut_thresh = 0.999
    else:
        alpha_dis = 10.0 * float(resolution)
        inv_denom = 1.0 / (2.0 * alpha_dis * alpha_dis)
        if name == '3dmatch' and descriptor == 'fcgf':
            cut_thresh = 0.999
        elif name == '3dmatch' and descriptor == 'fpfh':
            cut_thresh = 0.995
        elif descriptor in ('spinnet', 'd3feat'):
            cut_thresh = 0.85
        else:
            cut_thresh = 0.99

    # Tile selection: lane-dense multiples of 128.  512 is safe on every
    # generation (v7x has 64 MiB VMEM); bump to 1024 on 128-MiB chips
    # (v5e/v6e) for large problems to double arithmetic intensity.
    n128 = _round_up(N, 128)
    if tile is None:
        tile = min(512, n128)
        if n128 >= 2048:
            try:
                vmem = int(getattr(pltpu.get_tpu_info(),
                                   "vmem_capacity_bytes", 0) or 0)
                if vmem >= 100 * 1024 * 1024:
                    tile = 1024
            except Exception:
                pass
    assert tile % 128 == 0
    n_pad = _round_up(N, tile)
    nt = n_pad // tile

    a1 = correspondence[..., :3]
    a2 = correspondence[..., 3:]
    # Center each half per batch: pairwise distances are translation
    # invariant, but the |x|^2+|y|^2-2xy expansion is not cancellation-safe
    # for large offsets from the origin.
    a1 = a1 - jnp.mean(a1, axis=1, keepdims=True)
    a2 = a2 - jnp.mean(a2, axis=1, keepdims=True)
    if n_pad != N:
        pad = ((0, 0), (0, n_pad - N), (0, 0))
        # Padded points are far away in a1-space and at the origin in a2-space,
        # so any (valid, padded) pair has a huge compatibility distance ->
        # score == 0, and padded points never contaminate score @ score.
        a1 = jnp.pad(a1, pad, constant_values=_PAD_A1)
        a2 = jnp.pad(a2, pad, constant_values=_PAD_A2)

    A1, B1T = _embed_rows_cols(a1)   # (B, n_pad, 8), (B, 8, n_pad)
    A2, B2T = _embed_rows_cols(a2)

    vmem1 = (64 if tile > 512 else 32) * 1024 * 1024
    vmem2 = (96 if tile > 512 else 40) * 1024 * 1024

    # ---- Pass 1: score matrix in split (mask, delta) bf16 form ------------
    score_kernel = functools.partial(
        _score_kernel, use_predator=use_predator, inv_denom=inv_denom,
        cut_thresh=float(cut_thresh))

    out_tile_spec3 = lambda b, i, j: (b, i, j)
    mask, delta = pl.pallas_call(
        score_kernel,
        out_shape=(jax.ShapeDtypeStruct((B, n_pad, n_pad), jnp.bfloat16),
                   jax.ShapeDtypeStruct((B, n_pad, n_pad), jnp.bfloat16)),
        grid_spec=pltpu.PrefetchScalarGridSpec(
            num_scalar_prefetch=0,
            grid=(B, nt, nt),
            in_specs=[pl.BlockSpec((1, tile, 8), lambda b, i, j: (b, i, 0)),
                      pl.BlockSpec((1, tile, 8), lambda b, i, j: (b, i, 0)),
                      pl.BlockSpec((1, 8, tile), lambda b, i, j: (b, 0, j)),
                      pl.BlockSpec((1, 8, tile), lambda b, i, j: (b, 0, j))],
            out_specs=[pl.BlockSpec((1, tile, tile), out_tile_spec3),
                       pl.BlockSpec((1, tile, tile), out_tile_spec3)]),
        compiler_params=pltpu.CompilerParams(
            dimension_semantics=("parallel", "parallel", "parallel"),
            vmem_limit_bytes=vmem1),
    )(A1, A2, B1T, B2T)

    # ---- Pass 2: streaming MXU contraction, S .* (S @ S) ------------------
    contract_kernel = functools.partial(_contract_kernel, precision=precision)

    out = pl.pallas_call(
        contract_kernel,
        out_shape=jax.ShapeDtypeStruct((B, n_pad, n_pad), jnp.float32),
        grid_spec=pltpu.PrefetchScalarGridSpec(
            num_scalar_prefetch=0,
            grid=(B, nt, nt, nt),
            in_specs=[pl.BlockSpec((1, tile, tile), lambda b, i, j, k: (b, i, k)),
                      pl.BlockSpec((1, tile, tile), lambda b, i, j, k: (b, i, k)),
                      pl.BlockSpec((1, tile, tile), lambda b, i, j, k: (b, k, j)),
                      pl.BlockSpec((1, tile, tile), lambda b, i, j, k: (b, k, j)),
                      pl.BlockSpec((1, tile, tile), lambda b, i, j, k: (b, i, j)),
                      pl.BlockSpec((1, tile, tile), lambda b, i, j, k: (b, i, j))],
            out_specs=pl.BlockSpec((1, tile, tile),
                                   lambda b, i, j, k: (b, i, j))),
        compiler_params=pltpu.CompilerParams(
            dimension_semantics=("parallel", "parallel", "parallel",
                                 "arbitrary"),
            vmem_limit_bytes=vmem2),
    )(mask, delta, mask, delta, mask, delta)

    if n_pad != N:
        out = out[:, :N, :N]
    return out


def _reference(correspondence, resolution, name, descriptor, inlier_thresh):
    """Pure-JAX reference mirroring the torch module, for correctness checks."""
    a1 = correspondence[..., :3]
    a2 = correspondence[..., 3:]

    def cdist(x):
        d2 = jnp.sum((x[:, :, None, :] - x[:, None, :, :]) ** 2, axis=-1)
        return jnp.sqrt(jnp.maximum(d2, 0.0))

    dmat = jnp.abs(cdist(a1) - cdist(a2))
    if descriptor == 'predator':
        score = 1.0 - dmat ** 2 / inlier_thresh ** 2
        score = jnp.where(score < 0.999, 0.0, score)
    else:
        alpha_dis = 10.0 * resolution
        score = jnp.exp(-dmat ** 2 / (2.0 * alpha_dis * alpha_dis))
        if name == '3dmatch' and descriptor == 'fcgf':
            score = jnp.where(score < 0.999, 0.0, score)
        elif name == '3dmatch' and descriptor == 'fpfh':
            score = jnp.where(score < 0.995, 0.0, score)
        elif descriptor in ('spinnet', 'd3feat'):
            score = jnp.where(score < 0.85, 0.0, score)
        else:
            score = jnp.where(score < 0.99, 0.0, score)
    return score * jnp.einsum('bmn,bnk->bmk', score, score)


if __name__ == "__main__":
    key = jax.random.PRNGKey(0)
    B, N = 2, 128
    # Correspondences: pairs of 3-D points, small spread so some scores survive.
    correspondence = 0.05 * jax.random.normal(key, (B, N, 6), dtype=jnp.float32)

    resolution = 0.05        # typical 3DMatch voxel size
    name = '3dmatch'
    descriptor = 'fcgf'
    inlier_thresh = 0.10

    ref = _reference(correspondence, resolution, name, descriptor, inlier_thresh)

    # Default path: split (mask + delta) bf16 MXU contraction.
    out = graph_constructor_3dmatch(correspondence, resolution, name,
                                    descriptor, inlier_thresh)
    out = jax.block_until_ready(out)
    assert out.shape == (B, N, N)
    assert jnp.allclose(out, ref, atol=2e-3, rtol=2e-3), "split path mismatch"

    # f32 contraction path (accuracy check).
    out_f32 = graph_constructor_3dmatch(correspondence, resolution, name,
                                        descriptor, inlier_thresh,
                                        precision="f32")
    out_f32 = jax.block_until_ready(out_f32)
    assert jnp.allclose(out_f32, ref, atol=1e-3, rtol=1e-3), "f32 path mismatch"

    # Exercise the N-padding path (N not a multiple of 128): padded points must
    # not contaminate the valid block.
    N2 = 100
    corr2 = correspondence[:, :N2, :]
    ref2 = _reference(corr2, resolution, name, descriptor, inlier_thresh)
    out2 = graph_constructor_3dmatch(corr2, resolution, name, descriptor,
                                     inlier_thresh)
    out2 = jax.block_until_ready(out2)
    assert out2.shape == (B, N2, N2)
    assert jnp.allclose(out2, ref2, atol=2e-3, rtol=2e-3), "padded path mismatch"

    print("KERNEL_OK")
</pallas_src>

<mosaic_0001>
module attributes {stable_mosaic.version = 11 : i64} {
  func.func @_score_kernel(%arg0: i32, %arg1: i32, %arg2: i32, %arg3: memref<1x128x8xf32, #tpu.memory_space<vmem>>, %arg4: memref<1x128x8xf32, #tpu.memory_space<vmem>>, %arg5: memref<1x8x128xf32, #tpu.memory_space<vmem>>, %arg6: memref<1x8x128xf32, #tpu.memory_space<vmem>>, %arg7: memref<1x128x128xbf16, #tpu.memory_space<vmem>>, %arg8: memref<1x128x128xbf16, #tpu.memory_space<vmem>>) attributes {dimension_semantics = [#tpu.dimension_semantics<parallel>, #tpu.dimension_semantics<parallel>, #tpu.dimension_semantics<parallel>], iteration_bounds = array<i64: 2, 1, 1>, scalar_prefetch = 0 : i64, scratch_operands = 0 : i64, tpu.core_type = #tpu.core_type<tc>, window_params = [{transform_indices = @transform_0, window_bounds = array<i64: 1, 128, 8>}, {transform_indices = @transform_1, window_bounds = array<i64: 1, 128, 8>}, {transform_indices = @transform_2, window_bounds = array<i64: 1, 8, 128>}, {transform_indices = @transform_3, window_bounds = array<i64: 1, 8, 128>}, {transform_indices = @transform_4, window_bounds = array<i64: 1, 128, 128>}, {transform_indices = @transform_5, window_bounds = array<i64: 1, 128, 128>}]} {
    %c0 = arith.constant 0 : index
    %c0_0 = arith.constant 0 : index
    %c0_1 = arith.constant 0 : index
    %0 = vector.load %arg3[%c0, %c0_0, %c0_1] : memref<1x128x8xf32, #tpu.memory_space<vmem>>, vector<1x128x8xf32>
    %1 = vector.shape_cast %0 : vector<1x128x8xf32> to vector<128x8xf32>
    %c0_2 = arith.constant 0 : index
    %c0_3 = arith.constant 0 : index
    %c0_4 = arith.constant 0 : index
    %2 = vector.load %arg5[%c0_2, %c0_3, %c0_4] : memref<1x8x128xf32, #tpu.memory_space<vmem>>, vector<1x8x128xf32>
    %3 = vector.shape_cast %2 : vector<1x8x128xf32> to vector<8x128xf32>
    %cst = arith.constant dense<0.000000e+00> : vector<128x128xf32>
    %4 = tpu.matmul %1, %3, %cst {dimension_numbers = #tpu.dot_dimension_numbers<[1], [0], [0], [1], [0, 0, 1, 1], [], []>} : vector<128x8xf32>, vector<8x128xf32>, vector<128x128xf32> -> vector<128x128xf32>
    %cst_5 = arith.constant 0.000000e+00 : f32
    %5 = vector.broadcast %cst_5 : f32 to vector<128x128xf32>
    %6 = arith.maximumf %4, %5 : vector<128x128xf32>
    %c0_6 = arith.constant 0 : index
    %c0_7 = arith.constant 0 : index
    %c0_8 = arith.constant 0 : index
    %7 = vector.load %arg4[%c0_6, %c0_7, %c0_8] : memref<1x128x8xf32, #tpu.memory_space<vmem>>, vector<1x128x8xf32>
    %8 = vector.shape_cast %7 : vector<1x128x8xf32> to vector<128x8xf32>
    %c0_9 = arith.constant 0 : index
    %c0_10 = arith.constant 0 : index
    %c0_11 = arith.constant 0 : index
    %9 = vector.load %arg6[%c0_9, %c0_10, %c0_11] : memref<1x8x128xf32, #tpu.memory_space<vmem>>, vector<1x8x128xf32>
    %10 = vector.shape_cast %9 : vector<1x8x128xf32> to vector<8x128xf32>
    %cst_12 = arith.constant dense<0.000000e+00> : vector<128x128xf32>
    %11 = tpu.matmul %8, %10, %cst_12 {dimension_numbers = #tpu.dot_dimension_numbers<[1], [0], [0], [1], [0, 0, 1, 1], [], []>} : vector<128x8xf32>, vector<8x128xf32>, vector<128x128xf32> -> vector<128x128xf32>
    %cst_13 = arith.constant 0.000000e+00 : f32
    %12 = vector.broadcast %cst_13 : f32 to vector<128x128xf32>
    %13 = arith.maximumf %11, %12 : vector<128x128xf32>
    %14 = arith.addf %6, %13 : vector<128x128xf32>
    %15 = arith.mulf %6, %13 : vector<128x128xf32>
    %16 = math.sqrt %15 : vector<128x128xf32>
    %cst_14 = arith.constant 2.000000e+00 : f32
    %17 = vector.broadcast %cst_14 : f32 to vector<128x128xf32>
    %18 = arith.mulf %17, %16 : vector<128x128xf32>
    %19 = arith.subf %14, %18 : vector<128x128xf32>
    %cst_15 = arith.constant 0.000000e+00 : f32
    %20 = vector.broadcast %cst_15 : f32 to vector<128x128xf32>
    %21 = arith.maximumf %19, %20 : vector<128x128xf32>
    %cst_16 = arith.constant 0.000000e+00 : f32
    %22 = vector.broadcast %cst_16 : f32 to vector<128x128xf32>
    %23 = arith.subf %22, %21 : vector<128x128xf32>
    %cst_17 = arith.constant 2.000000e+00 : f32
    %24 = vector.broadcast %cst_17 : f32 to vector<128x128xf32>
    %25 = arith.mulf %23, %24 : vector<128x128xf32>
    %26 = math.exp %25 : vector<128x128xf32>
    %cst_18 = arith.constant 9.990000e-01 : f32
    %27 = vector.broadcast %cst_18 : f32 to vector<128x128xf32>
    %28 = arith.cmpf oge, %26, %27 : vector<128x128xf32>
    %29 = arith.extui %28 : vector<128x128xi1> to vector<128x128xi32>
    %30 = arith.sitofp %29 : vector<128x128xi32> to vector<128x128xf32>
    %31 = arith.truncf %30 : vector<128x128xf32> to vector<128x128xbf16>
    %c0_19 = arith.constant 0 : index
    %c0_20 = arith.constant 0 : index
    %c0_21 = arith.constant 0 : index
    %32 = vector.load %arg7[%c0_19, %c0_20, %c0_21] : memref<1x128x128xbf16, #tpu.memory_space<vmem>>, vector<1x128x128xbf16>
    %33 = vector.shape_cast %32 : vector<1x128x128xbf16> to vector<128x128xbf16>
    %34 = vector.shape_cast %31 : vector<128x128xbf16> to vector<1x128x128xbf16>
    tpu.vector_store %arg7[%c0_19, %c0_20, %c0_21], %34 {strides = array<i32>} : memref<1x128x128xbf16, #tpu.memory_space<vmem>>, vector<1x128x128xbf16>,
    %cst_22 = arith.constant 1.000000e+00 : f32
    %35 = vector.broadcast %cst_22 : f32 to vector<128x128xf32>
    %36 = arith.subf %26, %35 : vector<128x128xf32>
    %cst_23 = arith.constant 0.000000e+00 : f32
    %37 = vector.broadcast %cst_23 : f32 to vector<128x128xf32>
    %38 = arith.select %28, %36, %37 : vector<128x128xi1>, vector<128x128xf32>
    %39 = arith.truncf %38 : vector<128x128xf32> to vector<128x128xbf16>
    %c0_24 = arith.constant 0 : index
    %c0_25 = arith.constant 0 : index
    %c0_26 = arith.constant 0 : index
    %40 = vector.load %arg8[%c0_24, %c0_25, %c0_26] : memref<1x128x128xbf16, #tpu.memory_space<vmem>>, vector<1x128x128xbf16>
    %41 = vector.shape_cast %40 : vector<1x128x128xbf16> to vector<128x128xbf16>
    %42 = vector.shape_cast %39 : vector<128x128xbf16> to vector<1x128x128xbf16>
    tpu.vector_store %arg8[%c0_24, %c0_25, %c0_26], %42 {strides = array<i32>} : memref<1x128x128xbf16, #tpu.memory_space<vmem>>, vector<1x128x128xbf16>,
    return
  }
  func.func @transform_0(%arg0: i32, %arg1: i32, %arg2: i32) -> (i32, i32, i32) {
    %c0_i32 = arith.constant 0 : i32
    %c0_i32_0 = arith.constant 0 : i32
    return %arg0, %arg1, %c0_i32 : i32, i32, i32
  }
  func.func @transform_1(%arg0: i32, %arg1: i32, %arg2: i32) -> (i32, i32, i32) {
    %c0_i32 = arith.constant 0 : i32
    %c0_i32_0 = arith.constant 0 : i32
    return %arg0, %arg1, %c0_i32 : i32, i32, i32
  }
  func.func @transform_2(%arg0: i32, %arg1: i32, %arg2: i32) -> (i32, i32, i32) {
    %c0_i32 = arith.constant 0 : i32
    %c0_i32_0 = arith.constant 0 : i32
    return %arg0, %c0_i32, %arg2 : i32, i32, i32
  }
  func.func @transform_3(%arg0: i32, %arg1: i32, %arg2: i32) -> (i32, i32, i32) {
    %c0_i32 = arith.constant 0 : i32
    %c0_i32_0 = arith.constant 0 : i32
    return %arg0, %c0_i32, %arg2 : i32, i32, i32
  }
  func.func @transform_4(%arg0: i32, %arg1: i32, %arg2: i32) -> (i32, i32, i32) {
    %c0_i32 = arith.constant 0 : i32
    return %arg0, %arg1, %arg2 : i32, i32, i32
  }
  func.func @transform_5(%arg0: i32, %arg1: i32, %arg2: i32) -> (i32, i32, i32) {
    %c0_i32 = arith.constant 0 : i32
    return %arg0, %arg1, %arg2 : i32, i32, i32
  }
}

</mosaic_0001>

<llo_original>
// kernel: tpu_custom_call.1
$region0: #{tpu_custom_call.1}
  #allocation0 [shape = 'u32[]', space=smem, size = 0x4, offset = 0x4, fixed_abs, tag = 'smem constant byte address 0x4 - core index']
  #allocation1 [shape = 'u32[72,128]{1,0:T(1,128)}', space=vmem, size = 0x9000, scoped, tag = 'internal scratch']
  %s0 = inlined_call_operand.vmem [shape: f32[2,128,8], index: 0, kind: input, shape index: {}]
  %s1 = inlined_call_operand.vmem [shape: f32[2,128,8], index: 1, kind: input, shape index: {}]
  %s2 = inlined_call_operand.vmem [shape: f32[2,8,128], index: 2, kind: input, shape index: {}]
  %s3 = inlined_call_operand.vmem [shape: f32[2,8,128], index: 3, kind: input, shape index: {}]
  %s4 = inlined_call_operand.hbm [shape: bf16[2,128,128], index: 4, kind: output, shape index: {0}]
  %s5 = inlined_call_operand.hbm [shape: bf16[2,128,128], index: 5, kind: output, shape index: {1}]
  %6 = xla_tuple %s4, %s5
  %s7 = sld [smem:[#allocation0]]
  $region57: #{tpu_custom_call.1} parent=0
    _
  %s9 = ssub.s32 1, %s7
  %s10 = scalar_select 0, %s9, %s7
  $region1: #{tpu_custom_call.1} parent=0
    #allocation2 [shape = 'u8[65536]{0}', space=vmem, size = 0x10000, scoped, tag = 'output window, operand 0']
    #allocation3 [shape = 's32[2]{0}', space=sflag, size = 0x8, scoped, tag = 'scoped memory for tpu_custom_call.1']
    #allocation4 [shape = 'u8[65536]{0}', space=vmem, size = 0x10000, scoped, tag = 'output window, operand 1']
    #allocation5 [shape = 's32[2]{0}', space=sflag, size = 0x8, scoped, tag = 'scoped memory for tpu_custom_call.1']
    %11 = vsyncpa [#allocation3], 0
    %s12 = scalar_lea.sflag [#allocation3], 1
    %13 = vsyncpa %s12, 0
    %14 = vsyncpa [#allocation5], 0
    %s15 = scalar_lea.sflag [#allocation5], 1
    %16 = vsyncpa %s15, 0
    loop: start=0, step=1, limit=4
    $region2: #{tpu_custom_call.1} parent=1 // loop_pre_header
      _
    $region3: #{tpu_custom_call.1} parent=1 // loop_header
      %s18 = sphi 0, %s22
      %p19 = scmp.ge.s32.totalorder %s18, 4
      %s25 = sphi 0, %s44
      %s26 = sphi 0, %s40
      %s27 = sphi 0, %s36
      %s28 = sphi 0, %s25
      %s29 = sphi 0, %s26
      %s30 = sphi 0, %s27
      %s31 = sphi 0, %s28
      %s32 = sphi 0, %s29
      %s33 = sphi 0, %s30
      %s49 = sphi 0, %s51
      %s52 = sphi 0, %s49
      %s53 = sphi 0, %s52
      %s69 = sphi 0, %s53
      %s77 = sphi 0, %s79
      %s80 = sphi 0, %s77
      %s81 = sphi 0, %s80
      %s97 = sphi 0, %s81
      %s105 = sphi 0, %s107
      %s108 = sphi 0, %s105
      %s109 = sphi 0, %s108
      %s125 = sphi 0, %s109
      %s133 = sphi 0, %s135
      %s136 = sphi 0, %s133
      %s137 = sphi 0, %s136
      %s153 = sphi 0, %s137
      %s163 = sphi 0, %s165
      %s166 = sphi 0, %s163
      %s167 = sphi 0, %s166
      %s183 = sphi 0, %s167
      %s193 = sphi 0, %s195
      %s196 = sphi 0, %s193
      %s197 = sphi 0, %s196
      %s213 = sphi 0, %s197
    $region4: #{tpu_custom_call.1} parent=1 // loop_header_branch
      %21 = sbr.rel (%p19) target = $region8
    $region5: #{tpu_custom_call.1} parent=1 // loop_body
      %s23 = ssub.s32 %s18, 1
      %s24 = ssub.s32 %s18, 2
      %s34 = sadd.s32 1, %s27
      %p35 = scmp.ge.s32.totalorder %s34, 1
      %s36 = scalar_select %p35, 0, %s34
      %s37 = sadd.s32 1, %s26
      %s38 = scalar_select %p35, %s37, %s26
      %p39 = scmp.ge.s32.totalorder %s38, 1
      %s40 = scalar_select %p39, 0, %s38
      %s41 = sadd.s32 1, %s25
      %s42 = scalar_select %p39, %s41, %s25
      %p43 = scmp.ge.s32.totalorder %s42, 2
      %s44 = scalar_select %p43, 0, %s42
      %s45 = ssub.s32 %s25, %s44
      %s46 = ssub.s32 %s26, %s40
      %s47 = sor.u32 %s45, %s46
      %p48 = scmp.eq.s32.totalorder %s47, 0
      %s50 = sadd.s32 %s49, 1
      %s51 = scalar_select %p48, %s49, %s50
      %p54 = pneg %p48
      %p55 = scmp.eq.s32.totalorder %s18, 1
      %p56 = por %p54, %p55
      %p57 = scmp.ne.s32.totalorder %s49, %s52
      %p58 = scmp.eq.s32.totalorder %s18, 0
      %p59 = por %p57, %p58
      %p60 = scmp.ne.s32.totalorder %s49, %s52
      %p61 = scmp.eq.s32.totalorder %s23, 1
      %p62 = por %p60, %p61
      %p63 = scmp.ne.s32.totalorder %s52, %s53
      %p64 = scmp.eq.s32.totalorder %s23, 0
      %p65 = por %p63, %p64
      %p66 = scmp.ne.s32.totalorder %s52, %s53
      %p67 = scmp.eq.s32.totalorder %s24, 1
      %p68 = por %p66, %p67
      %p70 = scmp.ne.s32.totalorder %s53, %s69
      %p71 = scmp.eq.s32.totalorder %s24, 0
      %p72 = por %p70, %p71
      %s73 = ssub.s32 %s25, %s44
      %s74 = ssub.s32 %s26, %s40
      %s75 = sor.u32 %s73, %s74
      %p76 = scmp.eq.s32.totalorder %s75, 0
      %s78 = sadd.s32 %s77, 1
      %s79 = scalar_select %p76, %s77, %s78
      %p82 = pneg %p76
      %p83 = scmp.eq.s32.totalorder %s18, 1
      %p84 = por %p82, %p83
      %p85 = scmp.ne.s32.totalorder %s77, %s80
      %p86 = scmp.eq.s32.totalorder %s18, 0
      %p87 = por %p85, %p86
      %p88 = scmp.ne.s32.totalorder %s77, %s80
      %p89 = scmp.eq.s32.totalorder %s23, 1
      %p90 = por %p88, %p89
      %p91 = scmp.ne.s32.totalorder %s80, %s81
      %p92 = scmp.eq.s32.totalorder %s23, 0
      %p93 = por %p91, %p92
      %p94 = scmp.ne.s32.totalorder %s80, %s81
      %p95 = scmp.eq.s32.totalorder %s24, 1
      %p96 = por %p94, %p95
      %p98 = scmp.ne.s32.totalorder %s81, %s97
      %p99 = scmp.eq.s32.totalorder %s24, 0
      %p100 = por %p98, %p99
      %s101 = ssub.s32 %s25, %s44
      %s102 = ssub.s32 %s27, %s36
      %s103 = sor.u32 %s101, %s102
      %p104 = scmp.eq.s32.totalorder %s103, 0
      %s106 = sadd.s32 %s105, 1
      %s107 = scalar_select %p104, %s105, %s106
      %p110 = pneg %p104
      %p111 = scmp.eq.s32.totalorder %s18, 1
      %p112 = por %p110, %p111
      %p113 = scmp.ne.s32.totalorder %s105, %s108
      %p114 = scmp.eq.s32.totalorder %s18, 0
      %p115 = por %p113, %p114
      %p116 = scmp.ne.s32.totalorder %s105, %s108
      %p117 = scmp.eq.s32.totalorder %s23, 1
      %p118 = por %p116, %p117
      %p119 = scmp.ne.s32.totalorder %s108, %s109
      %p120 = scmp.eq.s32.totalorder %s23, 0
      %p121 = por %p119, %p120
      %p122 = scmp.ne.s32.totalorder %s108, %s109
      %p123 = scmp.eq.s32.totalorder %s24, 1
      %p124 = por %p122, %p123
      %p126 = scmp.ne.s32.totalorder %s109, %s125
      %p127 = scmp.eq.s32.totalorder %s24, 0
      %p128 = por %p126, %p127
      %s129 = ssub.s32 %s25, %s44
      %s130 = ssub.s32 %s27, %s36
      %s131 = sor.u32 %s129, %s130
      %p132 = scmp.eq.s32.totalorder %s131, 0
      %s134 = sadd.s32 %s133, 1
      %s135 = scalar_select %p132, %s133, %s134
      %p138 = pneg %p132
      %p139 = scmp.eq.s32.totalorder %s18, 1
      %p140 = por %p138, %p139
      %p141 = scmp.ne.s32.totalorder %s133, %s136
      %p142 = scmp.eq.s32.totalorder %s18, 0
      %p143 = por %p141, %p142
      %p144 = scmp.ne.s32.totalorder %s133, %s136
      %p145 = scmp.eq.s32.totalorder %s23, 1
      %p146 = por %p144, %p145
      %p147 = scmp.ne.s32.totalorder %s136, %s137
      %p148 = scmp.eq.s32.totalorder %s23, 0
      %p149 = por %p147, %p148
      %p150 = scmp.ne.s32.totalorder %s136, %s137
      %p151 = scmp.eq.s32.totalorder %s24, 1
      %p152 = por %p150, %p151
      %p154 = scmp.ne.s32.totalorder %s137, %s153
      %p155 = scmp.eq.s32.totalorder %s24, 0
      %p156 = por %p154, %p155
      %s157 = ssub.s32 %s25, %s44
      %s158 = ssub.s32 %s26, %s40
      %s159 = sor.u32 %s157, %s158
      %s160 = ssub.s32 %s27, %s36
      %s161 = sor.u32 %s159, %s160
      %p162 = scmp.eq.s32.totalorder %s161, 0
      %s164 = sadd.s32 %s163, 1
      %s165 = scalar_select %p162, %s163, %s164
      %p168 = pneg %p162
      %p169 = scmp.eq.s32.totalorder %s18, 1
      %p170 = por %p168, %p169
      %p171 = scmp.ne.s32.totalorder %s163, %s166
      %p172 = scmp.eq.s32.totalorder %s18, 0
      %p173 = por %p171, %p172
      %p174 = scmp.ne.s32.totalorder %s163, %s166
      %p175 = scmp.eq.s32.totalorder %s23, 1
      %p176 = por %p174, %p175
      %p177 = scmp.ne.s32.totalorder %s166, %s167
      %p178 = scmp.eq.s32.totalorder %s23, 0
      %p179 = por %p177, %p178
      %p180 = scmp.ne.s32.totalorder %s166, %s167
      %p181 = scmp.eq.s32.totalorder %s24, 1
      %p182 = por %p180, %p181
      %p184 = scmp.ne.s32.totalorder %s167, %s183
      %p185 = scmp.eq.s32.totalorder %s24, 0
      %p186 = por %p184, %p185
      %s187 = ssub.s32 %s25, %s44
      %s188 = ssub.s32 %s26, %s40
      %s189 = sor.u32 %s187, %s188
      %s190 = ssub.s32 %s27, %s36
      %s191 = sor.u32 %s189, %s190
      %p192 = scmp.eq.s32.totalorder %s191, 0
      %s194 = sadd.s32 %s193, 1
      %s195 = scalar_select %p192, %s193, %s194
      %p198 = pneg %p192
      %p199 = scmp.eq.s32.totalorder %s18, 1
      %p200 = por %p198, %p199
      %p201 = scmp.ne.s32.totalorder %s193, %s196
      %p202 = scmp.eq.s32.totalorder %s18, 0
      %p203 = por %p201, %p202
      %p204 = scmp.ne.s32.totalorder %s193, %s196
      %p205 = scmp.eq.s32.totalorder %s23, 1
      %p206 = por %p204, %p205
      %p207 = scmp.ne.s32.totalorder %s196, %s197
      %p208 = scmp.eq.s32.totalorder %s23, 0
      %p209 = por %p207, %p208
      %p210 = scmp.ne.s32.totalorder %s196, %s197
      %p211 = scmp.eq.s32.totalorder %s24, 1
      %p212 = por %p210, %p211
      %p214 = scmp.ne.s32.totalorder %s197, %s213
      %p215 = scmp.eq.s32.totalorder %s24, 0
      %p216 = por %p214, %p215
      %p217 = scmp.le.s32.totalorder 1, %s18
      %p218 = scmp.lt.s32.totalorder %s18, 3
      %p219 = pnand %p217, %p218
      %p220 = pneg %p219
      // Predicated region
      $region9: #{tpu_custom_call.1} parent=5 // pred_check
        _
      $region10: #{tpu_custom_call.1} parent=5 // pred_check_branch
        %222 = sbr.rel (%p219) target = $region12
      $region11: #{tpu_custom_call.1} parent=5 // pred_region
        %s223 = ssub.s32 %s18, 1
      $region12: #{tpu_custom_call.1} parent=5 // pred_fallthru
        _
      %p224 = scmp.lt.s32.totalorder %s18, 2
      // Predicated region
      $region13: #{tpu_custom_call.1} parent=5 // pred_check
        %p225 = pneg %p224
      $region14: #{tpu_custom_call.1} parent=5 // pred_check_branch
        %227 = sbr.rel (%p225) target = $region16
      $region15: #{tpu_custom_call.1} parent=5 // pred_region
        // Predicated region
        $region17: #{tpu_custom_call.1} parent=15 // pred_check
          %p228 = pneg %p59
        $region18: #{tpu_custom_call.1} parent=15 // pred_check_branch
          %230 = sbr.rel (%p228) target = $region20
        $region19: #{tpu_custom_call.1} parent=15 // pred_region
          %s231 = smul.u32 16, %s26
          %p232 = scmp.lt.s32.totalorder %s25, 1
          %s233 = scalar_select %p232, %s25, 1
          %p234 = scmp.lt.s32.totalorder %s231, 15
          %s235 = scalar_select %p234, %s231, 15
          %s236 = smul.addr %s233, 16
          %s237 = sadd.s32 %s235, %s236
          %s238 = smul.addr %s237, 8
          %s239 = scalar_lea.vmem %s0, %s238
          %s240 = smul.u32 16, %s26
        $region20: #{tpu_custom_call.1} parent=15 // pred_fallthru
          _
        // Predicated region
        $region21: #{tpu_custom_call.1} parent=15 // pred_check
          %p241 = pneg %p87
        $region22: #{tpu_custom_call.1} parent=15 // pred_check_branch
          %243 = sbr.rel (%p241) target = $region24
        $region23: #{tpu_custom_call.1} parent=15 // pred_region
          %s244 = smul.u32 16, %s26
          %p245 = scmp.lt.s32.totalorder %s25, 1
          %s246 = scalar_select %p245, %s25, 1
          %p247 = scmp.lt.s32.totalorder %s244, 15
          %s248 = scalar_select %p247, %s244, 15
          %s249 = smul.addr %s246, 16
          %s250 = sadd.s32 %s248, %s249
          %s251 = smul.addr %s250, 8
          %s252 = scalar_lea.vmem %s1, %s251
          %s253 = smul.u32 16, %s26
        $region24: #{tpu_custom_call.1} parent=15 // pred_fallthru
          _
        // Predicated region
        $region25: #{tpu_custom_call.1} parent=15 // pred_check
          %p254 = pneg %p115
        $region26: #{tpu_custom_call.1} parent=15 // pred_check_branch
          %256 = sbr.rel (%p254) target = $region28
        $region27: #{tpu_custom_call.1} parent=15 // pred_region
          %p257 = scmp.lt.s32.totalorder %s25, 1
          %s258 = scalar_select %p257, %s25, 1
          %p259 = scmp.lt.s32.totalorder %s27, 0
          %s260 = scalar_select %p259, %s27, 0
          %s261 = sadd.s32 %s260, %s258
          %s262 = smul.addr %s261, 8
          %s263 = scalar_lea.vmem %s2, %s262
        $region28: #{tpu_custom_call.1} parent=15 // pred_fallthru
          _
        // Predicated region
        $region29: #{tpu_custom_call.1} parent=15 // pred_check
          %p264 = pneg %p143
        $region30: #{tpu_custom_call.1} parent=15 // pred_check_branch
          %266 = sbr.rel (%p264) target = $region32
        $region31: #{tpu_custom_call.1} parent=15 // pred_region
          %p267 = scmp.lt.s32.totalorder %s25, 1
          %s268 = scalar_select %p267, %s25, 1
          %p269 = scmp.lt.s32.totalorder %s27, 0
          %s270 = scalar_select %p269, %s27, 0
          %s271 = sadd.s32 %s270, %s268
          %s272 = smul.addr %s271, 8
          %s273 = scalar_lea.vmem %s3, %s272
        $region32: #{tpu_custom_call.1} parent=15 // pred_fallthru
          _
      $region16: #{tpu_custom_call.1} parent=5 // pred_fallthru
        _
      %p274 = scmp.le.s32.totalorder 1, %s18
      %p275 = scmp.lt.s32.totalorder %s18, 3
      %p276 = pnand %p274, %p275
      %p277 = pneg %p276
      // Predicated region
      $region33: #{tpu_custom_call.1} parent=5 // pred_check
        _
      $region34: #{tpu_custom_call.1} parent=5 // pred_check_branch
        %279 = sbr.rel (%p276) target = $region36
      $region35: #{tpu_custom_call.1} parent=5 // pred_region
        %s280 = ssub.s32 %s18, 1
        %s281 = smul.u32 16, %s29
        %p282 = scmp.lt.s32.totalorder %s28, 1
        %s283 = scalar_select %p282, %s28, 1
        %p284 = scmp.lt.s32.totalorder %s281, 15
        %s285 = scalar_select %p284, %s281, 15
        %s286 = smul.addr %s283, 16
        %s287 = sadd.s32 %s285, %s286
        %s288 = smul.addr %s287, 8
        %s289 = scalar_lea.vmem %s0, %s288
        %p290 = pneg %p65
        %p291 = pneg %p62
        %s292 = smul.u32 16, %s29
        %p293 = scmp.lt.s32.totalorder %s28, 1
        %s294 = scalar_select %p293, %s28, 1
        %p295 = scmp.lt.s32.totalorder %s292, 15
        %s296 = scalar_select %p295, %s292, 15
        %s297 = smul.addr %s294, 16
        %s298 = sadd.s32 %s296, %s297
        %s299 = smul.addr %s298, 8
        %s300 = scalar_lea.vmem %s1, %s299
        %p301 = pneg %p93
        %p302 = pneg %p90
        %p303 = scmp.lt.s32.totalorder %s28, 1
        %s304 = scalar_select %p303, %s28, 1
        %p305 = scmp.lt.s32.totalorder %s30, 0
        %s306 = scalar_select %p305, %s30, 0
        %s307 = sadd.s32 %s306, %s304
        %s308 = smul.addr %s307, 8
        %s309 = scalar_lea.vmem %s2, %s308
        %p310 = pneg %p121
        %p311 = pneg %p118
        %p312 = scmp.lt.s32.totalorder %s28, 1
        %s313 = scalar_select %p312, %s28, 1
        %p314 = scmp.lt.s32.totalorder %s30, 0
        %s315 = scalar_select %p314, %s30, 0
        %s316 = sadd.s32 %s315, %s313
        %s317 = smul.addr %s316, 8
        %s318 = scalar_lea.vmem %s3, %s317
        %p319 = pneg %p149
        %p320 = pneg %p146
        %p321 = pneg %p179
        %p322 = pneg %p176
        %s323 = sand.u32 %s166, 1
        %s324 = scalar_lea.sflag [#allocation3], %s323
        %s325 = sand.u32 %s166, 1
        %s326 = smul.addr %s325, 64
        %s327 = scalar_lea.vmem [#allocation2], %s326
        %p328 = pneg %p209
        %p329 = pneg %p206
        %s330 = sand.u32 %s196, 1
        %s331 = scalar_lea.sflag [#allocation5], %s330
        %s332 = sand.u32 %s196, 1
        %s333 = smul.addr %s332, 64
        %s334 = scalar_lea.vmem [#allocation4], %s333
        %s335 = smul.u32 16, %s29
        %p336 = scmp.lt.s32.totalorder %s28, 1
        %s337 = scalar_select %p336, %s28, 1
        %p338 = scmp.lt.s32.totalorder %s335, 15
        %s339 = scalar_select %p338, %s335, 15
        %s340 = smul.addr %s337, 16
        %s341 = sadd.s32 %s339, %s340
        %s342 = smul.addr %s341, 8
        %s343 = scalar_lea.vmem %s0, %s342
        %s344 = smul.u32 16, %s29
        %s345 = smul.u32 16, %s29
        %p346 = scmp.lt.s32.totalorder %s28, 1
        %s347 = scalar_select %p346, %s28, 1
        %p348 = scmp.lt.s32.totalorder %s345, 15
        %s349 = scalar_select %p348, %s345, 15
        %s350 = smul.addr %s347, 16
        %s351 = sadd.s32 %s349, %s350
        %s352 = smul.addr %s351, 8
        %s353 = scalar_lea.vmem %s1, %s352
        %s354 = smul.u32 16, %s29
        %p355 = scmp.lt.s32.totalorder %s28, 1
        %s356 = scalar_select %p355, %s28, 1
        %p357 = scmp.lt.s32.totalorder %s30, 0
        %s358 = scalar_select %p357, %s30, 0
        %s359 = sadd.s32 %s358, %s356
        %s360 = smul.addr %s359, 8
        %s361 = scalar_lea.vmem %s2, %s360
        %p362 = scmp.lt.s32.totalorder %s28, 1
        %s363 = scalar_select %p362, %s28, 1
        %p364 = scmp.lt.s32.totalorder %s30, 0
        %s365 = scalar_select %p364, %s30, 0
        %s366 = sadd.s32 %s365, %s363
        %s367 = smul.addr %s366, 8
        %s368 = scalar_lea.vmem %s3, %s367
        %s369 = smul.u32 16, %s29
        %s370 = smul.u32 16, %s29
        %v371 = vld [vmem:[%s343] sm:$0xff]
        %v372 = vld [vmem:[%s343 + $0x8] sm:$0xff]
        %v373 = vld [vmem:[%s343 + $0x10] sm:$0xff]
        %v374 = vld [vmem:[%s343 + $0x18] sm:$0xff]
        %v375 = vld [vmem:[%s343 + $0x20] sm:$0xff]
        %v376 = vld [vmem:[%s343 + $0x28] sm:$0xff]
        %v377 = vld [vmem:[%s343 + $0x30] sm:$0xff]
        %v378 = vld [vmem:[%s343 + $0x38] sm:$0xff]
        %v379 = vld [vmem:[%s343 + $0x40] sm:$0xff]
        %v380 = vld [vmem:[%s343 + $0x48] sm:$0xff]
        %v381 = vld [vmem:[%s343 + $0x50] sm:$0xff]
        %v382 = vld [vmem:[%s343 + $0x58] sm:$0xff]
        %v383 = vld [vmem:[%s343 + $0x60] sm:$0xff]
        %v384 = vld [vmem:[%s343 + $0x68] sm:$0xff]
        %v385 = vld [vmem:[%s343 + $0x70] sm:$0xff]
        %v386 = vld [vmem:[%s343 + $0x78] sm:$0xff]
        %v387 = vld [vmem:[%s361] sm:$0xff]
        %vm388 = vcmask 64512
        %v390 = vsel %vm388, %v371, 0
        %v393 = vsel %vm388, %v372, 0
        %v396 = vsel %vm388, %v373, 0
        %v399 = vsel %vm388, %v374, 0
        %v402 = vsel %vm388, %v375, 0
        %v405 = vsel %vm388, %v376, 0
        %v408 = vsel %vm388, %v377, 0
        %v411 = vsel %vm388, %v378, 0
        %v414 = vsel %vm388, %v379, 0
        %v417 = vsel %vm388, %v380, 0
        %v420 = vsel %vm388, %v381, 0
        %v423 = vsel %vm388, %v382, 0
        %v426 = vsel %vm388, %v383, 0
        %v429 = vsel %vm388, %v384, 0
        %v432 = vsel %vm388, %v385, 0
        %v435 = vsel %vm388, %v386, 0
        %437 = vmatpush.msra.mxu0 0.0
        %438 = vmatpush.msra.mxu0 0.0
        %439 = vmatpush.msra.mxu0 0.0
        %440 = vmatpush.msra.mxu0 0.0
        %441 = vmatpush.msra.mxu0 0.0
        %442 = vmatpush.msra.mxu0 0.0
        %443 = vmatpush.msra.mxu0 0.0
        %444 = vmatpush.msra.mxu0 0.0
        %445 = vmatpush.msra.mxu0 0.0
        %446 = vmatpush.msra.mxu0 0.0
        %447 = vmatpush.msra.mxu0 0.0
        %448 = vmatpush.msra.mxu0 0.0
        %449 = vmatpush.msra.mxu0 0.0
        %450 = vmatpush.msra.mxu0 0.0
        %451 = vmatpush.msra.mxu0 0.0
        %452 = vmatpush.msra.mxu0 %v387
        %453 = vmatmul.f32.gmra.mxu0 %v390
        %v454 = vpop.f32.mrf.mxu0
        %v455 = vadd.f32 0.0, %v454
        %456 = vmatmul.f32.gmra.mxu0 %v393
        %v457 = vpop.f32.mrf.mxu0
        %v458 = vadd.f32 0.0, %v457
        %459 = vmatmul.f32.gmra.mxu0 %v396
        %v460 = vpop.f32.mrf.mxu0
        %v461 = vadd.f32 0.0, %v460
        %462 = vmatmul.f32.gmra.mxu0 %v399
        %v463 = vpop.f32.mrf.mxu0
        %v464 = vadd.f32 0.0, %v463
        %465 = vmatmul.f32.gmra.mxu0 %v402
        %v466 = vpop.f32.mrf.mxu0
        %v467 = vadd.f32 0.0, %v466
        %468 = vmatmul.f32.gmra.mxu0 %v405
        %v469 = vpop.f32.mrf.mxu0
        %v470 = vadd.f32 0.0, %v469
        %471 = vmatmul.f32.gmra.mxu0 %v408
        %v472 = vpop.f32.mrf.mxu0
        %v473 = vadd.f32 0.0, %v472
        %474 = vmatmul.f32.gmra.mxu0 %v411
        %v475 = vpop.f32.mrf.mxu0
        %v476 = vadd.f32 0.0, %v475
        %477 = vmatmul.f32.gmra.mxu0 %v414
        %v478 = vpop.f32.mrf.mxu0
        %v479 = vadd.f32 0.0, %v478
        %480 = vmatmul.f32.gmra.mxu0 %v417
        %v481 = vpop.f32.mrf.mxu0
        %v482 = vadd.f32 0.0, %v481
        %483 = vmatmul.f32.gmra.mxu0 %v420
        %v484 = vpop.f32.mrf.mxu0
        %v485 = vadd.f32 0.0, %v484
        %486 = vmatmul.f32.gmra.mxu0 %v423
        %v487 = vpop.f32.mrf.mxu0
        %v488 = vadd.f32 0.0, %v487
        %489 = vmatmul.f32.gmra.mxu0 %v426
        %v490 = vpop.f32.mrf.mxu0
        %v491 = vadd.f32 0.0, %v490
        %492 = vmatmul.f32.gmra.mxu0 %v429
        %v493 = vpop.f32.mrf.mxu0
        %v494 = vadd.f32 0.0, %v493
        %495 = vmatmul.f32.gmra.mxu0 %v432
        %v496 = vpop.f32.mrf.mxu0
        %v497 = vadd.f32 0.0, %v496
        %498 = vmatmul.f32.gmra.mxu0 %v435
        %v499 = vpop.f32.mrf.mxu0
        %v500 = vadd.f32 0.0, %v499
        %501 = vdwg.mxu0
        %v502 = vmax.f32 %v455, 0.0
        %v503 = vmax.f32 %v458, 0.0
        %v504 = vmax.f32 %v461, 0.0
        %v505 = vmax.f32 %v464, 0.0
        %v506 = vmax.f32 %v467, 0.0
        %v507 = vmax.f32 %v470, 0.0
        %v508 = vmax.f32 %v473, 0.0
        %v509 = vmax.f32 %v476, 0.0
        %v510 = vmax.f32 %v479, 0.0
        %v511 = vmax.f32 %v482, 0.0
        %v512 = vmax.f32 %v485, 0.0
        %v513 = vmax.f32 %v488, 0.0
        %v514 = vmax.f32 %v491, 0.0
        %v515 = vmax.f32 %v494, 0.0
        %v516 = vmax.f32 %v497, 0.0
        %v517 = vmax.f32 %v500, 0.0
        %v518 = vld [vmem:[%s353] sm:$0xff]
        %v519 = vld [vmem:[%s353 + $0x8] sm:$0xff]
        %v520 = vld [vmem:[%s353 + $0x10] sm:$0xff]
        %v521 = vld [vmem:[%s353 + $0x18] sm:$0xff]
        %v522 = vld [vmem:[%s353 + $0x20] sm:$0xff]
        %v523 = vld [vmem:[%s353 + $0x28] sm:$0xff]
        %v524 = vld [vmem:[%s353 + $0x30] sm:$0xff]
        %v525 = vld [vmem:[%s353 + $0x38] sm:$0xff]
        %v526 = vld [vmem:[%s353 + $0x40] sm:$0xff]
        %v527 = vld [vmem:[%s353 + $0x48] sm:$0xff]
        %v528 = vld [vmem:[%s353 + $0x50] sm:$0xff]
        %v529 = vld [vmem:[%s353 + $0x58] sm:$0xff]
        %v530 = vld [vmem:[%s353 + $0x60] sm:$0xff]
        %v531 = vld [vmem:[%s353 + $0x68] sm:$0xff]
        %v532 = vld [vmem:[%s353 + $0x70] sm:$0xff]
        %v533 = vld [vmem:[%s353 + $0x78] sm:$0xff]
        %v534 = vld [vmem:[%s368] sm:$0xff]
        %v536 = vsel %vm388, %v518, 0
        %v539 = vsel %vm388, %v519, 0
        %v542 = vsel %vm388, %v520, 0
        %v545 = vsel %vm388, %v521, 0
        %v548 = vsel %vm388, %v522, 0
        %v551 = vsel %vm388, %v523, 0
        %v554 = vsel %vm388, %v524, 0
        %v557 = vsel %vm388, %v525, 0
        %v560 = vsel %vm388, %v526, 0
        %v563 = vsel %vm388, %v527, 0
        %v566 = vsel %vm388, %v528, 0
        %v569 = vsel %vm388, %v529, 0
        %v572 = vsel %vm388, %v530, 0
        %v575 = vsel %vm388, %v531, 0
        %v578 = vsel %vm388, %v532, 0
        %v581 = vsel %vm388, %v533, 0
        %583 = vmatpush.msra.mxu0 0.0
        %584 = vmatpush.msra.mxu0 0.0
        %585 = vmatpush.msra.mxu0 0.0
        %586 = vmatpush.msra.mxu0 0.0
        %587 = vmatpush.msra.mxu0 0.0
        %588 = vmatpush.msra.mxu0 0.0
        %589 = vmatpush.msra.mxu0 0.0
        %590 = vmatpush.msra.mxu0 0.0
        %591 = vmatpush.msra.mxu0 0.0
        %592 = vmatpush.msra.mxu0 0.0
        %593 = vmatpush.msra.mxu0 0.0
        %594 = vmatpush.msra.mxu0 0.0
        %595 = vmatpush.msra.mxu0 0.0
        %596 = vmatpush.msra.mxu0 0.0
        %597 = vmatpush.msra.mxu0 0.0
        %598 = vmatpush.msra.mxu0 %v534
        %599 = vmatmul.f32.gmra.mxu0 %v536
        %v600 = vpop.f32.mrf.mxu0
        %v601 = vadd.f32 0.0, %v600
        %602 = vmatmul.f32.gmra.mxu0 %v539
        %v603 = vpop.f32.mrf.mxu0
        %v604 = vadd.f32 0.0, %v603
        %605 = vmatmul.f32.gmra.mxu0 %v542
        %v606 = vpop.f32.mrf.mxu0
        %v607 = vadd.f32 0.0, %v606
        %608 = vmatmul.f32.gmra.mxu0 %v545
        %v609 = vpop.f32.mrf.mxu0
        %v610 = vadd.f32 0.0, %v609
        %611 = vmatmul.f32.gmra.mxu0 %v548
        %v612 = vpop.f32.mrf.mxu0
        %v613 = vadd.f32 0.0, %v612
        %614 = vmatmul.f32.gmra.mxu0 %v551
        %v615 = vpop.f32.mrf.mxu0
        %v616 = vadd.f32 0.0, %v615
        %617 = vmatmul.f32.gmra.mxu0 %v554
        %v618 = vpop.f32.mrf.mxu0
        %v619 = vadd.f32 0.0, %v618
        %620 = vmatmul.f32.gmra.mxu0 %v557
        %v621 = vpop.f32.mrf.mxu0
        %v622 = vadd.f32 0.0, %v621
        %623 = vmatmul.f32.gmra.mxu0 %v560
        %v624 = vpop.f32.mrf.mxu0
        %v625 = vadd.f32 0.0, %v624
        %626 = vmatmul.f32.gmra.mxu0 %v563
        %v627 = vpop.f32.mrf.mxu0
        %v628 = vadd.f32 0.0, %v627
        %629 = vmatmul.f32.gmra.mxu0 %v566
        %v630 = vpop.f32.mrf.mxu0
        %v631 = vadd.f32 0.0, %v630
        %632 = vmatmul.f32.gmra.mxu0 %v569
        %v633 = vpop.f32.mrf.mxu0
        %v634 = vadd.f32 0.0, %v633
        %635 = vmatmul.f32.gmra.mxu0 %v572
        %v636 = vpop.f32.mrf.mxu0
        %v637 = vadd.f32 0.0, %v636
        %638 = vmatmul.f32.gmra.mxu0 %v575
        %v639 = vpop.f32.mrf.mxu0
        %v640 = vadd.f32 0.0, %v639
        %641 = vmatmul.f32.gmra.mxu0 %v578
        %v642 = vpop.f32.mrf.mxu0
        %v643 = vadd.f32 0.0, %v642
        %644 = vmatmul.f32.gmra.mxu0 %v581
        %v645 = vpop.f32.mrf.mxu0
        %v646 = vadd.f32 0.0, %v645
        %647 = vdwg.mxu0
        %v648 = vmax.f32 %v601, 0.0
        %v649 = vmax.f32 %v604, 0.0
        %v650 = vmax.f32 %v607, 0.0
        %v651 = vmax.f32 %v610, 0.0
        %v652 = vmax.f32 %v613, 0.0
        %v653 = vmax.f32 %v616, 0.0
        %v654 = vmax.f32 %v619, 0.0
        %v655 = vmax.f32 %v622, 0.0
        %v656 = vmax.f32 %v625, 0.0
        %v657 = vmax.f32 %v628, 0.0
        %v658 = vmax.f32 %v631, 0.0
        %v659 = vmax.f32 %v634, 0.0
        %v660 = vmax.f32 %v637, 0.0
        %v661 = vmax.f32 %v640, 0.0
        %v662 = vmax.f32 %v643, 0.0
        %v663 = vmax.f32 %v646, 0.0
        %v664 = vadd.f32 %v502, %v648
        %v665 = vadd.f32 %v503, %v649
        %v666 = vadd.f32 %v504, %v650
        %v667 = vadd.f32 %v505, %v651
        %v668 = vadd.f32 %v506, %v652
        %v669 = vadd.f32 %v507, %v653
        %v670 = vadd.f32 %v508, %v654
        %v671 = vadd.f32 %v509, %v655
        %v672 = vadd.f32 %v510, %v656
        %v673 = vadd.f32 %v511, %v657
        %v674 = vadd.f32 %v512, %v658
        %v675 = vadd.f32 %v513, %v659
        %v676 = vadd.f32 %v514, %v660
        %v677 = vadd.f32 %v515, %v661
        %v678 = vadd.f32 %v516, %v662
        %v679 = vadd.f32 %v517, %v663
        %v680 = vmul.f32 %v502, %v648
        %v681 = vmul.f32 %v503, %v649
        %v682 = vmul.f32 %v504, %v650
        %v683 = vmul.f32 %v505, %v651
        %v684 = vmul.f32 %v506, %v652
        %v685 = vmul.f32 %v507, %v653
        %v686 = vmul.f32 %v508, %v654
        %v687 = vmul.f32 %v509, %v655
        %v688 = vmul.f32 %v510, %v656
        %v689 = vmul.f32 %v511, %v657
        %v690 = vmul.f32 %v512, %v658
        %v691 = vmul.f32 %v513, %v659
        %v692 = vmul.f32 %v514, %v660
        %v693 = vmul.f32 %v515, %v661
        %v694 = vmul.f32 %v516, %v662
        %v695 = vmul.f32 %v517, %v663
        %v696 = vrsqrt.pop %v680
        %v697 = vmul.f32 %v696, %v680
        %v698 = vmul.f32 %v697, %v696
        %v699 = vmul.f32 0.5, %v698
        %v700 = vsub.f32 1.5, %v699
        %v701 = vmul.f32 %v696, %v700
        %v702 = vmul.f32 %v680, %v701
        %vm703 = vcmp.eq.f32.partialorder %v680, inf
        %v704 = vsel %vm703, %v680, %v702
        %vm705 = vcmp.eq.f32.partialorder %v680, 0.0
        %v706 = vand.u32 %v680, 2147483648
        %v707 = vsel %vm705, %v706, %v704
        %v708 = vrsqrt.pop %v681
        %v709 = vmul.f32 %v708, %v681
        %v710 = vmul.f32 %v709, %v708
        %v711 = vmul.f32 0.5, %v710
        %v712 = vsub.f32 1.5, %v711
        %v713 = vmul.f32 %v708, %v712
        %v714 = vmul.f32 %v681, %v713
        %vm715 = vcmp.eq.f32.partialorder %v681, inf
        %v716 = vsel %vm715, %v681, %v714
        %vm717 = vcmp.eq.f32.partialorder %v681, 0.0
        %v718 = vand.u32 %v681, 2147483648
        %v719 = vsel %vm717, %v718, %v716
        %v720 = vrsqrt.pop %v682
        %v721 = vmul.f32 %v720, %v682
        %v722 = vmul.f32 %v721, %v720
        %v723 = vmul.f32 0.5, %v722
        %v724 = vsub.f32 1.5, %v723
        %v725 = vmul.f32 %v720, %v724
        %v726 = vmul.f32 %v682, %v725
        %vm727 = vcmp.eq.f32.partialorder %v682, inf
        %v728 = vsel %vm727, %v682, %v726
        %vm729 = vcmp.eq.f32.partialorder %v682, 0.0
        %v730 = vand.u32 %v682, 2147483648
        %v731 = vsel %vm729, %v730, %v728
        %v732 = vrsqrt.pop %v683
        %v733 = vmul.f32 %v732, %v683
        %v734 = vmul.f32 %v733, %v732
        %v735 = vmul.f32 0.5, %v734
        %v736 = vsub.f32 1.5, %v735
        %v737 = vmul.f32 %v732, %v736
        %v738 = vmul.f32 %v683, %v737
        %vm739 = vcmp.eq.f32.partialorder %v683, inf
        %v740 = vsel %vm739, %v683, %v738
        %vm741 = vcmp.eq.f32.partialorder %v683, 0.0
        %v742 = vand.u32 %v683, 2147483648
        %v743 = vsel %vm741, %v742, %v740
        %v744 = vrsqrt.pop %v684
        %v745 = vmul.f32 %v744, %v684
        %v746 = vmul.f32 %v745, %v744
        %v747 = vmul.f32 0.5, %v746
        %v748 = vsub.f32 1.5, %v747
        %v749 = vmul.f32 %v744, %v748
        %v750 = vmul.f32 %v684, %v749
        %vm751 = vcmp.eq.f32.partialorder %v684, inf
        %v752 = vsel %vm751, %v684, %v750
        %vm753 = vcmp.eq.f32.partialorder %v684, 0.0
        %v754 = vand.u32 %v684, 2147483648
        %v755 = vsel %vm753, %v754, %v752
        %v756 = vrsqrt.pop %v685
        %v757 = vmul.f32 %v756, %v685
        %v758 = vmul.f32 %v757, %v756
        %v759 = vmul.f32 0.5, %v758
        %v760 = vsub.f32 1.5, %v759
        %v761 = vmul.f32 %v756, %v760
        %v762 = vmul.f32 %v685, %v761
        %vm763 = vcmp.eq.f32.partialorder %v685, inf
        %v764 = vsel %vm763, %v685, %v762
        %vm765 = vcmp.eq.f32.partialorder %v685, 0.0
        %v766 = vand.u32 %v685, 2147483648
        %v767 = vsel %vm765, %v766, %v764
        %v768 = vrsqrt.pop %v686
        %v769 = vmul.f32 %v768, %v686
        %v770 = vmul.f32 %v769, %v768
        %v771 = vmul.f32 0.5, %v770
        %v772 = vsub.f32 1.5, %v771
        %v773 = vmul.f32 %v768, %v772
        %v774 = vmul.f32 %v686, %v773
        %vm775 = vcmp.eq.f32.partialorder %v686, inf
        %v776 = vsel %vm775, %v686, %v774
        %vm777 = vcmp.eq.f32.partialorder %v686, 0.0
        %v778 = vand.u32 %v686, 2147483648
        %v779 = vsel %vm777, %v778, %v776
        %v780 = vrsqrt.pop %v687
        %v781 = vmul.f32 %v780, %v687
        %v782 = vmul.f32 %v781, %v780
        %v783 = vmul.f32 0.5, %v782
        %v784 = vsub.f32 1.5, %v783
        %v785 = vmul.f32 %v780, %v784
        %v786 = vmul.f32 %v687, %v785
        %vm787 = vcmp.eq.f32.partialorder %v687, inf
        %v788 = vsel %vm787, %v687, %v786
        %vm789 = vcmp.eq.f32.partialorder %v687, 0.0
        %v790 = vand.u32 %v687, 2147483648
        %v791 = vsel %vm789, %v790, %v788
        %v792 = vrsqrt.pop %v688
        %v793 = vmul.f32 %v792, %v688
        %v794 = vmul.f32 %v793, %v792
        %v795 = vmul.f32 0.5, %v794
        %v796 = vsub.f32 1.5, %v795
        %v797 = vmul.f32 %v792, %v796
        %v798 = vmul.f32 %v688, %v797
        %vm799 = vcmp.eq.f32.partialorder %v688, inf
        %v800 = vsel %vm799, %v688, %v798
        %vm801 = vcmp.eq.f32.partialorder %v688, 0.0
        %v802 = vand.u32 %v688, 2147483648
        %v803 = vsel %vm801, %v802, %v800
        %v804 = vrsqrt.pop %v689
        %v805 = vmul.f32 %v804, %v689
        %v806 = vmul.f32 %v805, %v804
        %v807 = vmul.f32 0.5, %v806
        %v808 = vsub.f32 1.5, %v807
        %v809 = vmul.f32 %v804, %v808
        %v810 = vmul.f32 %v689, %v809
        %vm811 = vcmp.eq.f32.partialorder %v689, inf
        %v812 = vsel %vm811, %v689, %v810
        %vm813 = vcmp.eq.f32.partialorder %v689, 0.0
        %v814 = vand.u32 %v689, 2147483648
        %v815 = vsel %vm813, %v814, %v812
        %v816 = vrsqrt.pop %v690
        %v817 = vmul.f32 %v816, %v690
        %v818 = vmul.f32 %v817, %v816
        %v819 = vmul.f32 0.5, %v818
        %v820 = vsub.f32 1.5, %v819
        %v821 = vmul.f32 %v816, %v820
        %v822 = vmul.f32 %v690, %v821
        %vm823 = vcmp.eq.f32.partialorder %v690, inf
        %v824 = vsel %vm823, %v690, %v822
        %vm825 = vcmp.eq.f32.partialorder %v690, 0.0
        %v826 = vand.u32 %v690, 2147483648
        %v827 = vsel %vm825, %v826, %v824
        %v828 = vrsqrt.pop %v691
        %v829 = vmul.f32 %v828, %v691
        %v830 = vmul.f32 %v829, %v828
        %v831 = vmul.f32 0.5, %v830
        %v832 = vsub.f32 1.5, %v831
        %v833 = vmul.f32 %v828, %v832
        %v834 = vmul.f32 %v691, %v833
        %vm835 = vcmp.eq.f32.partialorder %v691, inf
        %v836 = vsel %vm835, %v691, %v834
        %vm837 = vcmp.eq.f32.partialorder %v691, 0.0
        %v838 = vand.u32 %v691, 2147483648
        %v839 = vsel %vm837, %v838, %v836
        %v840 = vrsqrt.pop %v692
        %v841 = vmul.f32 %v840, %v692
        %v842 = vmul.f32 %v841, %v840
        %v843 = vmul.f32 0.5, %v842
        %v844 = vsub.f32 1.5, %v843
        %v845 = vmul.f32 %v840, %v844
        %v846 = vmul.f32 %v692, %v845
        %vm847 = vcmp.eq.f32.partialorder %v692, inf
        %v848 = vsel %vm847, %v692, %v846
        %vm849 = vcmp.eq.f32.partialorder %v692, 0.0
        %v850 = vand.u32 %v692, 2147483648
        %v851 = vsel %vm849, %v850, %v848
        %v852 = vrsqrt.pop %v693
        %v853 = vmul.f32 %v852, %v693
        %v854 = vmul.f32 %v853, %v852
        %v855 = vmul.f32 0.5, %v854
        %v856 = vsub.f32 1.5, %v855
        %v857 = vmul.f32 %v852, %v856
        %v858 = vmul.f32 %v693, %v857
        %vm859 = vcmp.eq.f32.partialorder %v693, inf
        %v860 = vsel %vm859, %v693, %v858
        %vm861 = vcmp.eq.f32.partialorder %v693, 0.0
        %v862 = vand.u32 %v693, 2147483648
        %v863 = vsel %vm861, %v862, %v860
        %v864 = vrsqrt.pop %v694
        %v865 = vmul.f32 %v864, %v694
        %v866 = vmul.f32 %v865, %v864
        %v867 = vmul.f32 0.5, %v866
        %v868 = vsub.f32 1.5, %v867
        %v869 = vmul.f32 %v864, %v868
        %v870 = vmul.f32 %v694, %v869
        %vm871 = vcmp.eq.f32.partialorder %v694, inf
        %v872 = vsel %vm871, %v694, %v870
        %vm873 = vcmp.eq.f32.partialorder %v694, 0.0
        %v874 = vand.u32 %v694, 2147483648
        %v875 = vsel %vm873, %v874, %v872
        %v876 = vrsqrt.pop %v695
        %v877 = vmul.f32 %v876, %v695
        %v878 = vmul.f32 %v877, %v876
        %v879 = vmul.f32 0.5, %v878
        %v880 = vsub.f32 1.5, %v879
        %v881 = vmul.f32 %v876, %v880
        %v882 = vmul.f32 %v695, %v881
        %vm883 = vcmp.eq.f32.partialorder %v695, inf
        %v884 = vsel %vm883, %v695, %v882
        %vm885 = vcmp.eq.f32.partialorder %v695, 0.0
        %v886 = vand.u32 %v695, 2147483648
        %v887 = vsel %vm885, %v886, %v884
        %v888 = vmul.f32 %v707, 2.0
        %v889 = vmul.f32 %v719, 2.0
        %v890 = vmul.f32 %v731, 2.0
        %v891 = vmul.f32 %v743, 2.0
        %v892 = vmul.f32 %v755, 2.0
        %v893 = vmul.f32 %v767, 2.0
        %v894 = vmul.f32 %v779, 2.0
        %v895 = vmul.f32 %v791, 2.0
        %v896 = vmul.f32 %v803, 2.0
        %v897 = vmul.f32 %v815, 2.0
        %v898 = vmul.f32 %v827, 2.0
        %v899 = vmul.f32 %v839, 2.0
        %v900 = vmul.f32 %v851, 2.0
        %v901 = vmul.f32 %v863, 2.0
        %v902 = vmul.f32 %v875, 2.0
        %v903 = vmul.f32 %v887, 2.0
        %v904 = vsub.f32 %v664, %v888
        %v905 = vsub.f32 %v665, %v889
        %v906 = vsub.f32 %v666, %v890
        %v907 = vsub.f32 %v667, %v891
        %v908 = vsub.f32 %v668, %v892
        %v909 = vsub.f32 %v669, %v893
        %v910 = vsub.f32 %v670, %v894
        %v911 = vsub.f32 %v671, %v895
        %v912 = vsub.f32 %v672, %v896
        %v913 = vsub.f32 %v673, %v897
        %v914 = vsub.f32 %v674, %v898
        %v915 = vsub.f32 %v675, %v899
        %v916 = vsub.f32 %v676, %v900
        %v917 = vsub.f32 %v677, %v901
        %v918 = vsub.f32 %v678, %v902
        %v919 = vsub.f32 %v679, %v903
        %v920 = vmax.f32 %v904, 0.0
        %v921 = vmax.f32 %v905, 0.0
        %v922 = vmax.f32 %v906, 0.0
        %v923 = vmax.f32 %v907, 0.0
        %v924 = vmax.f32 %v908, 0.0
        %v925 = vmax.f32 %v909, 0.0
        %v926 = vmax.f32 %v910, 0.0
        %v927 = vmax.f32 %v911, 0.0
        %v928 = vmax.f32 %v912, 0.0
        %v929 = vmax.f32 %v913, 0.0
        %v930 = vmax.f32 %v914, 0.0
        %v931 = vmax.f32 %v915, 0.0
        %v932 = vmax.f32 %v916, 0.0
        %v933 = vmax.f32 %v917, 0.0
        %v934 = vmax.f32 %v918, 0.0
        %v935 = vmax.f32 %v919, 0.0
        %v936 = vsub.f32 0.0, %v920
        %v937 = vsub.f32 0.0, %v921
        %v938 = vsub.f32 0.0, %v922
        %v939 = vsub.f32 0.0, %v923
        %v940 = vsub.f32 0.0, %v924
        %v941 = vsub.f32 0.0, %v925
        %v942 = vsub.f32 0.0, %v926
        %v943 = vsub.f32 0.0, %v927
        %v944 = vsub.f32 0.0, %v928
        %v945 = vsub.f32 0.0, %v929
        %v946 = vsub.f32 0.0, %v930
        %v947 = vsub.f32 0.0, %v931
        %v948 = vsub.f32 0.0, %v932
        %v949 = vsub.f32 0.0, %v933
        %v950 = vsub.f32 0.0, %v934
        %v951 = vsub.f32 0.0, %v935
        %v952 = vmul.f32 %v936, 2.0
        %v953 = vmul.f32 %v937, 2.0
        %v954 = vmul.f32 %v938, 2.0
        %v955 = vmul.f32 %v939, 2.0
        %v956 = vmul.f32 %v940, 2.0
        %v957 = vmul.f32 %v941, 2.0
        %v958 = vmul.f32 %v942, 2.0
        %v959 = vmul.f32 %v943, 2.0
        %v960 = vmul.f32 %v944, 2.0
        %v961 = vmul.f32 %v945, 2.0
        %v962 = vmul.f32 %v946, 2.0
        %v963 = vmul.f32 %v947, 2.0
        %v964 = vmul.f32 %v948, 2.0
        %v965 = vmul.f32 %v949, 2.0
        %v966 = vmul.f32 %v950, 2.0
        %v967 = vmul.f32 %v951, 2.0
        %v968 = vmul.f32 %v952, 1.442695
        %v969 = vpow.pop %v968
        %v970 = vmul.f32 %v953, 1.442695
        %v971 = vpow.pop %v970
        %v972 = vmul.f32 %v954, 1.442695
        %v973 = vpow.pop %v972
        %v974 = vmul.f32 %v955, 1.442695
        %v975 = vpow.pop %v974
        %v976 = vmul.f32 %v956, 1.442695
        %v977 = vpow.pop %v976
        %v978 = vmul.f32 %v957, 1.442695
        %v979 = vpow.pop %v978
        %v980 = vmul.f32 %v958, 1.442695
        %v981 = vpow.pop %v980
        %v982 = vmul.f32 %v959, 1.442695
        %v983 = vpow.pop %v982
        %v984 = vmul.f32 %v960, 1.442695
        %v985 = vpow.pop %v984
        %v986 = vmul.f32 %v961, 1.442695
        %v987 = vpow.pop %v986
        %v988 = vmul.f32 %v962, 1.442695
        %v989 = vpow.pop %v988
        %v990 = vmul.f32 %v963, 1.442695
        %v991 = vpow.pop %v990
        %v992 = vmul.f32 %v964, 1.442695
        %v993 = vpow.pop %v992
        %v994 = vmul.f32 %v965, 1.442695
        %v995 = vpow.pop %v994
        %v996 = vmul.f32 %v966, 1.442695
        %v997 = vpow.pop %v996
        %v998 = vmul.f32 %v967, 1.442695
        %v999 = vpow.pop %v998
        %vm1000 = vcmp.ge.f32.partialorder %v969, 0.999
        %vm1001 = vcmp.ge.f32.partialorder %v971, 0.999
        %vm1002 = vcmp.ge.f32.partialorder %v973, 0.999
        %vm1003 = vcmp.ge.f32.partialorder %v975, 0.999
        %vm1004 = vcmp.ge.f32.partialorder %v977, 0.999
        %vm1005 = vcmp.ge.f32.partialorder %v979, 0.999
        %vm1006 = vcmp.ge.f32.partialorder %v981, 0.999
        %vm1007 = vcmp.ge.f32.partialorder %v983, 0.999
        %vm1008 = vcmp.ge.f32.partialorder %v985, 0.999
        %vm1009 = vcmp.ge.f32.partialorder %v987, 0.999
        %vm1010 = vcmp.ge.f32.partialorder %v989, 0.999
        %vm1011 = vcmp.ge.f32.partialorder %v991, 0.999
        %vm1012 = vcmp.ge.f32.partialorder %v993, 0.999
        %vm1013 = vcmp.ge.f32.partialorder %v995, 0.999
        %vm1014 = vcmp.ge.f32.partialorder %v997, 0.999
        %vm1015 = vcmp.ge.f32.partialorder %v999, 0.999
        %v1016 = vsel %vm1000, 1, 0
        %v1017 = vsel %vm1001, 1, 0
        %v1018 = vsel %vm1002, 1, 0
        %v1019 = vsel %vm1003, 1, 0
        %v1020 = vsel %vm1004, 1, 0
        %v1021 = vsel %vm1005, 1, 0
        %v1022 = vsel %vm1006, 1, 0
        %v1023 = vsel %vm1007, 1, 0
        %v1024 = vsel %vm1008, 1, 0
        %v1025 = vsel %vm1009, 1, 0
        %v1026 = vsel %vm1010, 1, 0
        %v1027 = vsel %vm1011, 1, 0
        %v1028 = vsel %vm1012, 1, 0
        %v1029 = vsel %vm1013, 1, 0
        %v1030 = vsel %vm1014, 1, 0
        %v1031 = vsel %vm1015, 1, 0
        %v1032 = vcvt.s32.f32 %v1016
        %v1033 = vcvt.s32.f32 %v1017
        %v1034 = vcvt.s32.f32 %v1018
        %v1035 = vcvt.s32.f32 %v1019
        %v1036 = vcvt.s32.f32 %v1020
        %v1037 = vcvt.s32.f32 %v1021
        %v1038 = vcvt.s32.f32 %v1022
        %v1039 = vcvt.s32.f32 %v1023
        %v1040 = vcvt.s32.f32 %v1024
        %v1041 = vcvt.s32.f32 %v1025
        %v1042 = vcvt.s32.f32 %v1026
        %v1043 = vcvt.s32.f32 %v1027
        %v1044 = vcvt.s32.f32 %v1028
        %v1045 = vcvt.s32.f32 %v1029
        %v1046 = vcvt.s32.f32 %v1030
        %v1047 = vcvt.s32.f32 %v1031
        %v1048 = vpack.c.bf16 %v1032, %v1032
        %v1049 = vpack.c.bf16 %v1033, %v1033
        %v1050 = vpack.c.bf16 %v1034, %v1034
        %v1051 = vpack.c.bf16 %v1035, %v1035
        %v1052 = vpack.c.bf16 %v1036, %v1036
        %v1053 = vpack.c.bf16 %v1037, %v1037
        %v1054 = vpack.c.bf16 %v1038, %v1038
        %v1055 = vpack.c.bf16 %v1039, %v1039
        %v1056 = vpack.c.bf16 %v1040, %v1040
        %v1057 = vpack.c.bf16 %v1041, %v1041
        %v1058 = vpack.c.bf16 %v1042, %v1042
        %v1059 = vpack.c.bf16 %v1043, %v1043
        %v1060 = vpack.c.bf16 %v1044, %v1044
        %v1061 = vpack.c.bf16 %v1045, %v1045
        %v1062 = vpack.c.bf16 %v1046, %v1046
        %v1063 = vpack.c.bf16 %v1047, %v1047
        %1064 = vst [vmem:[%s327] sm:$0xf] %v1048
        %1065 = vst [vmem:[%s327 + $0x4] sm:$0xf] %v1049
        %1066 = vst [vmem:[%s327 + $0x8] sm:$0xf] %v1050
        %1067 = vst [vmem:[%s327 + $0xc] sm:$0xf] %v1051
        %1068 = vst [vmem:[%s327 + $0x10] sm:$0xf] %v1052
        %1069 = vst [vmem:[%s327 + $0x14] sm:$0xf] %v1053
        %1070 = vst [vmem:[%s327 + $0x18] sm:$0xf] %v1054
        %1071 = vst [vmem:[%s327 + $0x1c] sm:$0xf] %v1055
        %1072 = vst [vmem:[%s327 + $0x20] sm:$0xf] %v1056
        %1073 = vst [vmem:[%s327 + $0x24] sm:$0xf] %v1057
        %1074 = vst [vmem:[%s327 + $0x28] sm:$0xf] %v1058
        %1075 = vst [vmem:[%s327 + $0x2c] sm:$0xf] %v1059
        %1076 = vst [vmem:[%s327 + $0x30] sm:$0xf] %v1060
        %1077 = vst [vmem:[%s327 + $0x34] sm:$0xf] %v1061
        %1078 = vst [vmem:[%s327 + $0x38] sm:$0xf] %v1062
        %1079 = vst [vmem:[%s327 + $0x3c] sm:$0xf] %v1063
        %v1080 = vsub.f32 %v969, 1.0
        %v1081 = vsub.f32 %v971, 1.0
        %v1082 = vsub.f32 %v973, 1.0
        %v1083 = vsub.f32 %v975, 1.0
        %v1084 = vsub.f32 %v977, 1.0
        %v1085 = vsub.f32 %v979, 1.0
        %v1086 = vsub.f32 %v981, 1.0
        %v1087 = vsub.f32 %v983, 1.0
        %v1088 = vsub.f32 %v985, 1.0
        %v1089 = vsub.f32 %v987, 1.0
        %v1090 = vsub.f32 %v989, 1.0
        %v1091 = vsub.f32 %v991, 1.0
        %v1092 = vsub.f32 %v993, 1.0
        %v1093 = vsub.f32 %v995, 1.0
        %v1094 = vsub.f32 %v997, 1.0
        %v1095 = vsub.f32 %v999, 1.0
        %v1096 = vsel %vm1000, %v1080, 0.0
        %v1097 = vsel %vm1001, %v1081, 0.0
        %v1098 = vsel %vm1002, %v1082, 0.0
        %v1099 = vsel %vm1003, %v1083, 0.0
        %v1100 = vsel %vm1004, %v1084, 0.0
        %v1101 = vsel %vm1005, %v1085, 0.0
        %v1102 = vsel %vm1006, %v1086, 0.0
        %v1103 = vsel %vm1007, %v1087, 0.0
        %v1104 = vsel %vm1008, %v1088, 0.0
        %v1105 = vsel %vm1009, %v1089, 0.0
        %v1106 = vsel %vm1010, %v1090, 0.0
        %v1107 = vsel %vm1011, %v1091, 0.0
        %v1108 = vsel %vm1012, %v1092, 0.0
        %v1109 = vsel %vm1013, %v1093, 0.0
        %v1110 = vsel %vm1014, %v1094, 0.0
        %v1111 = vsel %vm1015, %v1095, 0.0
        %v1112 = vpack.c.bf16 %v1096, %v1096
        %v1113 = vpack.c.bf16 %v1097, %v1097
        %v1114 = vpack.c.bf16 %v1098, %v1098
        %v1115 = vpack.c.bf16 %v1099, %v1099
        %v1116 = vpack.c.bf16 %v1100, %v1100
        %v1117 = vpack.c.bf16 %v1101, %v1101
        %v1118 = vpack.c.bf16 %v1102, %v1102
        %v1119 = vpack.c.bf16 %v1103, %v1103
        %v1120 = vpack.c.bf16 %v1104, %v1104
        %v1121 = vpack.c.bf16 %v1105, %v1105
        %v1122 = vpack.c.bf16 %v1106, %v1106
        %v1123 = vpack.c.bf16 %v1107, %v1107
        %v1124 = vpack.c.bf16 %v1108, %v1108
        %v1125 = vpack.c.bf16 %v1109, %v1109
        %v1126 = vpack.c.bf16 %v1110, %v1110
        %v1127 = vpack.c.bf16 %v1111, %v1111
        %1128 = vst [vmem:[%s334] sm:$0xf] %v1112
        %1129 = vst [vmem:[%s334 + $0x4] sm:$0xf] %v1113
        %1130 = vst [vmem:[%s334 + $0x8] sm:$0xf] %v1114
        %1131 = vst [vmem:[%s334 + $0xc] sm:$0xf] %v1115
        %1132 = vst [vmem:[%s334 + $0x10] sm:$0xf] %v1116
        %1133 = vst [vmem:[%s334 + $0x14] sm:$0xf] %v1117
        %1134 = vst [vmem:[%s334 + $0x18] sm:$0xf] %v1118
        %1135 = vst [vmem:[%s334 + $0x1c] sm:$0xf] %v1119
        %1136 = vst [vmem:[%s334 + $0x20] sm:$0xf] %v1120
        %1137 = vst [vmem:[%s334 + $0x24] sm:$0xf] %v1121
        %1138 = vst [vmem:[%s334 + $0x28] sm:$0xf] %v1122
        %1139 = vst [vmem:[%s334 + $0x2c] sm:$0xf] %v1123
        %1140 = vst [vmem:[%s334 + $0x30] sm:$0xf] %v1124
        %1141 = vst [vmem:[%s334 + $0x34] sm:$0xf] %v1125
        %1142 = vst [vmem:[%s334 + $0x38] sm:$0xf] %v1126
        %1143 = vst [vmem:[%s334 + $0x3c] sm:$0xf] %v1127
        %s1144 = sand.u32 %s166, 1
        %s1145 = scalar_lea.sflag [#allocation3], %s1144
        %s1146 = sand.u32 %s166, 1
        %s1147 = smul.addr %s1146, 64
        %s1148 = scalar_lea.vmem [#allocation2], %s1147
        %s1149 = sand.u32 %s196, 1
        %s1150 = scalar_lea.sflag [#allocation5], %s1149
        %s1151 = sand.u32 %s196, 1
        %s1152 = smul.addr %s1151, 64
        %s1153 = scalar_lea.vmem [#allocation4], %s1152
        // Predicated region
        $region37: #{tpu_custom_call.1} parent=35 // pred_check
          %p1154 = pneg %p176
        $region38: #{tpu_custom_call.1} parent=35 // pred_check_branch
          %1156 = sbr.rel (%p1154) target = $region40
        $region39: #{tpu_custom_call.1} parent=35 // pred_region
          %s1157 = smul.u32 16, %s29
          %1159 = vsyncadd %s1145, 0
          %s1160 = sadd.s32 %s30, %s1157
          %s1161 = smul.addr %s28, 16
          %s1162 = sadd.s32 %s1160, %s1161
          %s1163 = smul.addr %s1162, 4
          %s1164 = scalar_lea.hbm %s4, %s1163
          %s1165 = sshll.u32 %s1148, 4
          %s1166 = int_to_ptr.vmem [resolvable:$true] %s1165
          %s1167 = sshll.u32 %s1164, 4
          %s1168 = int_to_ptr.hbm [resolvable:$true] %s1167
          %1173 = dma.vmem_to_hbm [thread:$0]  %s1166, 1024, %s1168, %s1145, 64, 64, 4
        $region40: #{tpu_custom_call.1} parent=35 // pred_fallthru
          _
        // Predicated region
        $region41: #{tpu_custom_call.1} parent=35 // pred_check
          %p1174 = pneg %p206
        $region42: #{tpu_custom_call.1} parent=35 // pred_check_branch
          %1176 = sbr.rel (%p1174) target = $region44
        $region43: #{tpu_custom_call.1} parent=35 // pred_region
          %s1177 = smul.u32 16, %s29
          %1179 = vsyncadd %s1150, 0
          %s1180 = sadd.s32 %s30, %s1177
          %s1181 = smul.addr %s28, 16
          %s1182 = sadd.s32 %s1180, %s1181
          %s1183 = smul.addr %s1182, 4
          %s1184 = scalar_lea.hbm %s5, %s1183
          %s1185 = sshll.u32 %s1153, 4
          %s1186 = int_to_ptr.vmem [resolvable:$true] %s1185
          %s1187 = sshll.u32 %s1184, 4
          %s1188 = int_to_ptr.hbm [resolvable:$true] %s1187
          %1193 = dma.vmem_to_hbm [thread:$0]  %s1186, 1024, %s1188, %s1150, 64, 64, 4
        $region44: #{tpu_custom_call.1} parent=35 // pred_fallthru
          _
      $region36: #{tpu_custom_call.1} parent=5 // pred_fallthru
        _
      %p1194 = scmp.le.s32.totalorder 2, %s18
      // Predicated region
      $region45: #{tpu_custom_call.1} parent=5 // pred_check
        %p1195 = pneg %p1194
      $region46: #{tpu_custom_call.1} parent=5 // pred_check_branch
        %1197 = sbr.rel (%p1195) target = $region48
      $region47: #{tpu_custom_call.1} parent=5 // pred_region
        %s1198 = ssub.s32 %s18, 2
        // Predicated region
        $region49: #{tpu_custom_call.1} parent=47 // pred_check
          %p1199 = pneg %p182
        $region50: #{tpu_custom_call.1} parent=47 // pred_check_branch
          %1201 = sbr.rel (%p1199) target = $region52
        $region51: #{tpu_custom_call.1} parent=47 // pred_region
          %s1202 = sand.u32 %s167, 1
          %s1203 = scalar_lea.sflag [#allocation3], %s1202
          %s1204 = sand.u32 %s167, 1
          %s1205 = smul.addr %s1204, 64
          %s1206 = scalar_lea.vmem [#allocation2], %s1205
          %1208 = dma.done %s1203, 1024
        $region52: #{tpu_custom_call.1} parent=47 // pred_fallthru
          _
        // Predicated region
        $region53: #{tpu_custom_call.1} parent=47 // pred_check
          %p1209 = pneg %p212
        $region54: #{tpu_custom_call.1} parent=47 // pred_check_branch
          %1211 = sbr.rel (%p1209) target = $region56
        $region55: #{tpu_custom_call.1} parent=47 // pred_region
          %s1212 = sand.u32 %s197, 1
          %s1213 = scalar_lea.sflag [#allocation5], %s1212
          %s1214 = sand.u32 %s197, 1
          %s1215 = smul.addr %s1214, 64
          %s1216 = scalar_lea.vmem [#allocation4], %s1215
          %1218 = dma.done %s1213, 1024
        $region56: #{tpu_custom_call.1} parent=47 // pred_fallthru
          _
      $region48: #{tpu_custom_call.1} parent=5 // pred_fallthru
        _
    $region6: #{tpu_custom_call.1} parent=1 // loop_footer
      %s22 = sadd.s32 1, %s18
    $region7: #{tpu_custom_call.1} parent=1 // loop_footer_branch
      %17 = sbr.rel target = $region3
    $region8: #{tpu_custom_call.1} parent=1 // loop_exit
      _
    %1219 = vsyncpa [#allocation3], 1
    %s1220 = scalar_lea.sflag [#allocation3], 1
    %1221 = vsyncpa %s1220, 1
    %1222 = vsyncpa [#allocation5], 1
    %s1223 = scalar_lea.sflag [#allocation5], 1
    %1224 = vsyncpa %s1223, 1

</llo_original>
